<compile_context>
chip_gen: v6e
topology: v6e:2x2x1
jax: 0.10.0
libtpu: 0.0.40
codegen_flags: <defaults>
</compile_context>

<pallas_src>
import math

import jax
import jax.numpy as jnp
from jax import lax
from jax.experimental import pallas as pl
from jax.experimental.pallas import tpu as pltpu


def _round_up(a, b):
    return (a + b - 1) // b * b


def _cdiv(a, b):
    return (a + b - 1) // b


def _ffn_kernel(x_ref, w1_ref, b1_ref, w2_ref, b2_ref, o_ref, acc_ref):
    # x_ref:  (tm, dim_model)       w1_ref: (tf, dim_model)  [W1 pre-transposed]
    # b1_ref: (1, tf)               w2_ref: (tf, dim_model)  b2_ref: (1, dim_model)
    # o_ref:  (tm, dim_model)       acc_ref: (tm, dim_model) f32 scratch
    f = pl.program_id(1)

    @pl.when(f == 0)
    def _():
        # Fold the linear2 bias into the accumulator init: saves one zero-fill
        # store and one add pass per M tile.
        acc_ref[...] = jnp.broadcast_to(
            b2_ref[...].astype(jnp.float32), acc_ref.shape)

    # linear1 for this ff slab: x (tm, dm) contracted with W1^T (tf, dm) over dm.
    # Native-dtype operands straight to the MXU, f32 accumulation.
    h = lax.dot_general(
        x_ref[...], w1_ref[...],
        dimension_numbers=(((1,), (1,)), ((), ())),
        preferred_element_type=jnp.float32)
    h = h + b1_ref[...].astype(jnp.float32)

    # Exact (erf-based) GELU matching torch.nn.GELU() default; kept in f32.
    # (VPU polynomial work, but free filler under MXU-bound regimes.)
    h = 0.5 * h * (1.0 + lax.erf(h * (1.0 / math.sqrt(2.0))))

    # TODO(synk): dropout is identity here (inference / eval mode); training-mode
    # stochastic dropout would use pltpu.prng_seed + pltpu.prng_random_bits.

    # linear2 partial product for this ff slab, accumulated in f32.
    acc_ref[...] += jnp.dot(h.astype(w2_ref.dtype), w2_ref[...],
                            preferred_element_type=jnp.float32)

    @pl.when(f == pl.num_programs(1) - 1)
    def _():
        o_ref[...] = acc_ref[...].astype(o_ref.dtype)


def feed_forward(x, w1, b1, w2, b2, *, tm=512, tf=2048, compute_dtype=None):
    """FFN forward.

    x:  (batch, seq, dim_model)
    w1: (dim_model, dim_ff), b1: (dim_ff,)
    w2: (dim_ff, dim_model), b2: (dim_model,)
    compute_dtype: optional dtype (e.g. jnp.bfloat16) for the MXU operands;
        output keeps x's original dtype.
    Returns (batch, seq, dim_model).
    """
    batch, seq, dim_model = x.shape
    dim_ff = w1.shape[1]
    M = batch * seq
    out_dtype = x.dtype

    if compute_dtype is not None:
        x = x.astype(compute_dtype)
        w1, b1 = w1.astype(compute_dtype), b1.astype(compute_dtype)
        w2, b2 = w2.astype(compute_dtype), b2.astype(compute_dtype)

    x_isz = jnp.dtype(x.dtype).itemsize
    w_isz = jnp.dtype(w1.dtype).itemsize

    # --- device-aware VMEM budget (v7x has 64 MiB/TC, v5e/v6e 128 MiB) ------
    try:
        vmem_cap = int(pltpu.get_tpu_info().vmem_capacity_bytes)
    except Exception:
        vmem_cap = 64 * 1024 * 1024   # conservative fallback (v7x)
    vmem_budget = vmem_cap - (8 << 20)   # headroom for Mosaic internal scratch

    # --- M tiling: MXU-aligned; keep >= 2 tiles for megacore when possible --
    TM_ALIGN = 256
    tm = max(TM_ALIGN, min(_round_up(tm, TM_ALIGN), _round_up(M, TM_ALIGN)))
    if _cdiv(M, tm) < 2 and tm > TM_ALIGN:
        # Split so the "parallel" M axis can shard across v7x's two TensorCores.
        tm = max(TM_ALIGN, _round_up(_cdiv(M, 2), TM_ALIGN))

    def footprint(tm_, tf_):
        # Double-buffered input/output tiles + resident f32 accumulator.
        return (2 * tm_ * dim_model * x_isz            # x tile
                + 2 * tm_ * dim_model * x_isz          # out tile
                + tm_ * dim_model * 4                  # f32 accumulator scratch
                + 2 * 2 * tf_ * dim_model * w_isz      # W1 + W2 slabs
                + 2 * (tf_ + dim_model) * w_isz)       # biases

    # --- ff tiling: resident weights if they fit, else 128-aligned slabs ----
    dim_ff_res = _round_up(dim_ff, 8)          # sublane alignment
    if footprint(tm, dim_ff_res) <= vmem_budget:
        # Whole W1/W2 fit in VMEM: weight index_maps are constant over the
        # grid, so weights are DMAed from HBM exactly once (never re-streamed
        # per M tile).
        tf = dim_ff_res
    else:
        # Stream dim_ff in power-of-two slabs (>=128 lanes); shrink the slab,
        # then the M tile, until the footprint fits this device's VMEM.
        tf = max(128, min(tf, dim_ff_res))
        tf = max(128, 1 << (tf.bit_length() - 1))
        while footprint(tm, tf) > vmem_budget and tf > 128:
            tf //= 2
        while footprint(tm, tf) > vmem_budget and tm > TM_ALIGN:
            tm -= TM_ALIGN

    dim_ff_pad = _round_up(dim_ff, tf)
    M_pad = _round_up(M, tm)

    # --- operand prep --------------------------------------------------------
    x2d = x.reshape(M, dim_model)
    if M_pad != M:
        x2d = jnp.pad(x2d, ((0, M_pad - M), (0, 0)))

    # Pre-transpose W1 so each ff slab is a contiguous row block in HBM.
    w1t = w1.T                     # (dim_ff, dim_model)
    w2p, b1p = w2, b1
    if dim_ff_pad != dim_ff:
        pad = dim_ff_pad - dim_ff
        w1t = jnp.pad(w1t, ((0, pad), (0, 0)))
        w2p = jnp.pad(w2p, ((0, pad), (0, 0)))   # zero rows => zero contribution
        b1p = jnp.pad(b1p, (0, pad))
    b1_2d = b1p.reshape(1, dim_ff_pad)
    b2_2d = b2.reshape(1, dim_model)

    grid = (M_pad // tm, dim_ff_pad // tf)
    weight_passes = 1 if tf == dim_ff_pad else grid[0]

    est = footprint(tm, tf)
    vmem_limit = int(min(vmem_cap - (2 << 20), max(32 << 20, est + (4 << 20))))

    cost = pl.CostEstimate(
        flops=2 * 2 * M_pad * dim_model * dim_ff_pad,
        transcendentals=M_pad * dim_ff_pad,
        bytes_accessed=int(M_pad * dim_model * x_isz * 2
                           + 2 * dim_ff_pad * dim_model * w_isz * weight_passes
                           + (dim_ff_pad + dim_model) * w_isz),
    )

    out2d = pl.pallas_call(
        _ffn_kernel,
        out_shape=jax.ShapeDtypeStruct((M_pad, dim_model), out_dtype),
        grid_spec=pltpu.PrefetchScalarGridSpec(
            num_scalar_prefetch=0,
            grid=grid,
            in_specs=[
                pl.BlockSpec((tm, dim_model), lambda i, f: (i, 0)),     # x tile
                pl.BlockSpec((tf, dim_model), lambda i, f: (f, 0)),     # W1^T slab
                pl.BlockSpec((1, tf), lambda i, f: (0, f)),             # b1 slab
                pl.BlockSpec((tf, dim_model), lambda i, f: (f, 0)),     # W2 slab
                pl.BlockSpec((1, dim_model), lambda i, f: (0, 0)),      # b2
            ],
            out_specs=pl.BlockSpec((tm, dim_model), lambda i, f: (i, 0)),
            scratch_shapes=[pltpu.VMEM((tm, dim_model), jnp.float32)],
        ),
        compiler_params=pltpu.CompilerParams(
            dimension_semantics=("parallel", "arbitrary"),
            vmem_limit_bytes=vmem_limit,
        ),
        cost_estimate=cost,
    )(x2d, w1t, b1_2d, w2p, b2_2d)

    if M_pad != M:
        out2d = out2d[:M]
    return out2d.reshape(batch, seq, dim_model).astype(out_dtype)


def _init_linear(key, fan_in, fan_out):
    """Deterministic init mimicking nn.Linear's uniform(-1/sqrt(fan_in), ...).
    Returns weight as (fan_in, fan_out) (pre-transposed) and bias (fan_out,)."""
    kw, kb = jax.random.split(key)
    bound = 1.0 / math.sqrt(fan_in)
    w = jax.random.uniform(kw, (fan_in, fan_out), jnp.float32, -bound, bound)
    b = jax.random.uniform(kb, (fan_out,), jnp.float32, -bound, bound)
    return w, b


if __name__ == "__main__":
    batch, seq, dim_model, dim_ff = 2, 8, 32, 64

    key = jax.random.PRNGKey(0)
    kx, k1, k2 = jax.random.split(key, 3)

    x = jax.random.normal(kx, (batch, seq, dim_model), jnp.float32)
    w1, b1 = _init_linear(k1, dim_model, dim_ff)   # linear1: dim_model -> dim_ff
    w2, b2 = _init_linear(k2, dim_ff, dim_model)   # linear2: dim_ff -> dim_model

    out = feed_forward(x, w1, b1, w2, b2)
    jax.block_until_ready(out)

    # reference check (pure JAX, exact GELU, eval-mode dropout)
    h_ref = x @ w1 + b1
    h_ref = 0.5 * h_ref * (1.0 + jax.lax.erf(h_ref / math.sqrt(2.0)))
    ref = h_ref @ w2 + b2
    assert out.shape == (batch, seq, dim_model)
    assert jnp.allclose(out, ref, atol=1e-5, rtol=1e-5)

    print("KERNEL_OK")
</pallas_src>

<mosaic_0001>
module attributes {stable_mosaic.version = 11 : i64} {
  func.func @_ffn_kernel(%arg0: i32, %arg1: i32, %arg2: memref<256x32xf32, #tpu.memory_space<vmem>>, %arg3: memref<64x32xf32, #tpu.memory_space<vmem>>, %arg4: memref<1x64xf32, #tpu.memory_space<vmem>>, %arg5: memref<64x32xf32, #tpu.memory_space<vmem>>, %arg6: memref<1x32xf32, #tpu.memory_space<vmem>>, %arg7: memref<256x32xf32, #tpu.memory_space<vmem>>, %arg8: memref<256x32xf32, #tpu.memory_space<vmem>>) attributes {dimension_semantics = [#tpu.dimension_semantics<parallel>, #tpu.dimension_semantics<arbitrary>], iteration_bounds = array<i64: 1, 1>, scalar_prefetch = 0 : i64, scratch_operands = 1 : i64, tpu.core_type = #tpu.core_type<tc>, window_params = [{transform_indices = @transform_0, window_bounds = array<i64: 256, 32>}, {transform_indices = @transform_1, window_bounds = array<i64: 64, 32>}, {transform_indices = @transform_2, window_bounds = array<i64: 1, 64>}, {transform_indices = @transform_3, window_bounds = array<i64: 64, 32>}, {pipeline_mode = #tpu.pipeline_mode<synchronous>, transform_indices = @transform_4, window_bounds = array<i64: 1, 32>}, {transform_indices = @transform_5, window_bounds = array<i64: 256, 32>}]} {
    %c0_i32 = arith.constant 0 : i32
    %0 = arith.cmpi eq, %arg1, %c0_i32 : i32
    %1 = arith.extui %0 : i1 to i32
    %c0_i32_0 = arith.constant 0 : i32
    %2 = arith.cmpi ne, %1, %c0_i32_0 : i32
    scf.if %2 {
      %c0_18 = arith.constant 0 : index
      %c0_19 = arith.constant 0 : index
      %25 = vector.load %arg6[%c0_18, %c0_19] : memref<1x32xf32, #tpu.memory_space<vmem>>, vector<1x32xf32>
      %26 = vector.shape_cast %25 : vector<1x32xf32> to vector<1x32xf32>
      %27 = vector.broadcast %26 : vector<1x32xf32> to vector<256x32xf32>
      %c0_20 = arith.constant 0 : index
      %c0_21 = arith.constant 0 : index
      %28 = vector.load %arg8[%c0_20, %c0_21] : memref<256x32xf32, #tpu.memory_space<vmem>>, vector<256x32xf32>
      tpu.vector_store %arg8[%c0_20, %c0_21], %27 {strides = array<i32>} : memref<256x32xf32, #tpu.memory_space<vmem>>, vector<256x32xf32>,
    } else {
    }
    %c0 = arith.constant 0 : index
    %c0_1 = arith.constant 0 : index
    %3 = vector.load %arg2[%c0, %c0_1] : memref<256x32xf32, #tpu.memory_space<vmem>>, vector<256x32xf32>
    %c0_2 = arith.constant 0 : index
    %c0_3 = arith.constant 0 : index
    %4 = vector.load %arg3[%c0_2, %c0_3] : memref<64x32xf32, #tpu.memory_space<vmem>>, vector<64x32xf32>
    %cst = arith.constant dense<0.000000e+00> : vector<256x64xf32>
    %5 = tpu.matmul %3, %4, %cst {dimension_numbers = #tpu.dot_dimension_numbers<[1], [1], [0], [0], [0, 0, 1, 0], [], []>} : vector<256x32xf32>, vector<64x32xf32>, vector<256x64xf32> -> vector<256x64xf32>
    %c0_4 = arith.constant 0 : index
    %c0_5 = arith.constant 0 : index
    %6 = vector.load %arg4[%c0_4, %c0_5] : memref<1x64xf32, #tpu.memory_space<vmem>>, vector<1x64xf32>
    %7 = vector.broadcast %6 : vector<1x64xf32> to vector<256x64xf32>
    %8 = arith.addf %5, %7 : vector<256x64xf32>
    %cst_6 = arith.constant 5.000000e-01 : f32
    %9 = vector.broadcast %cst_6 : f32 to vector<256x64xf32>
    %10 = arith.mulf %9, %8 : vector<256x64xf32>
    %cst_7 = arith.constant 0.707106769 : f32
    %11 = vector.broadcast %cst_7 : f32 to vector<256x64xf32>
    %12 = arith.mulf %8, %11 : vector<256x64xf32>
    %13 = math.erf %12 : vector<256x64xf32>
    %cst_8 = arith.constant 1.000000e+00 : f32
    %14 = vector.broadcast %cst_8 : f32 to vector<256x64xf32>
    %15 = arith.addf %14, %13 : vector<256x64xf32>
    %16 = arith.mulf %10, %15 : vector<256x64xf32>
    %c0_9 = arith.constant 0 : index
    %c0_10 = arith.constant 0 : index
    %17 = vector.load %arg8[%c0_9, %c0_10] : memref<256x32xf32, #tpu.memory_space<vmem>>, vector<256x32xf32>
    %c0_11 = arith.constant 0 : index
    %c0_12 = arith.constant 0 : index
    %18 = vector.load %arg5[%c0_11, %c0_12] : memref<64x32xf32, #tpu.memory_space<vmem>>, vector<64x32xf32>
    %cst_13 = arith.constant dense<0.000000e+00> : vector<256x32xf32>
    %19 = tpu.matmul %16, %18, %cst_13 {dimension_numbers = #tpu.dot_dimension_numbers<[1], [0], [0], [1], [0, 0, 1, 1], [], []>} : vector<256x64xf32>, vector<64x32xf32>, vector<256x32xf32> -> vector<256x32xf32>
    %20 = arith.addf %17, %19 : vector<256x32xf32>
    %c0_14 = arith.constant 0 : index
    %c0_15 = arith.constant 0 : index
    %21 = vector.load %arg8[%c0_14, %c0_15] : memref<256x32xf32, #tpu.memory_space<vmem>>, vector<256x32xf32>
    tpu.vector_store %arg8[%c0_14, %c0_15], %20 {strides = array<i32>} : memref<256x32xf32, #tpu.memory_space<vmem>>, vector<256x32xf32>,
    %c0_i32_16 = arith.constant 0 : i32
    %22 = arith.cmpi eq, %arg1, %c0_i32_16 : i32
    %23 = arith.extui %22 : i1 to i32
    %c0_i32_17 = arith.constant 0 : i32
    %24 = arith.cmpi ne, %23, %c0_i32_17 : i32
    scf.if %24 {
      %c0_18 = arith.constant 0 : index
      %c0_19 = arith.constant 0 : index
      %25 = vector.load %arg8[%c0_18, %c0_19] : memref<256x32xf32, #tpu.memory_space<vmem>>, vector<256x32xf32>
      %c0_20 = arith.constant 0 : index
      %c0_21 = arith.constant 0 : index
      %26 = vector.load %arg7[%c0_20, %c0_21] : memref<256x32xf32, #tpu.memory_space<vmem>>, vector<256x32xf32>
      tpu.vector_store %arg7[%c0_20, %c0_21], %25 {strides = array<i32>} : memref<256x32xf32, #tpu.memory_space<vmem>>, vector<256x32xf32>,
    } else {
    }
    return
  }
  func.func @transform_0(%arg0: i32, %arg1: i32) -> (i32, i32) {
    %c0_i32 = arith.constant 0 : i32
    %c0_i32_0 = arith.constant 0 : i32
    return %arg0, %c0_i32 : i32, i32
  }
  func.func @transform_1(%arg0: i32, %arg1: i32) -> (i32, i32) {
    %c0_i32 = arith.constant 0 : i32
    %c0_i32_0 = arith.constant 0 : i32
    return %arg1, %c0_i32 : i32, i32
  }
  func.func @transform_2(%arg0: i32, %arg1: i32) -> (i32, i32) {
    %c0_i32 = arith.constant 0 : i32
    %c0_i32_0 = arith.constant 0 : i32
    return %c0_i32, %arg1 : i32, i32
  }
  func.func @transform_3(%arg0: i32, %arg1: i32) -> (i32, i32) {
    %c0_i32 = arith.constant 0 : i32
    %c0_i32_0 = arith.constant 0 : i32
    return %arg1, %c0_i32 : i32, i32
  }
  func.func @transform_4(%arg0: i32, %arg1: i32) -> (i32, i32) {
    %c0_i32 = arith.constant 0 : i32
    %c0_i32_0 = arith.constant 0 : i32
    %c0_i32_1 = arith.constant 0 : i32
    return %c0_i32, %c0_i32_0 : i32, i32
  }
  func.func @transform_5(%arg0: i32, %arg1: i32) -> (i32, i32) {
    %c0_i32 = arith.constant 0 : i32
    %c0_i32_0 = arith.constant 0 : i32
    return %arg0, %c0_i32 : i32, i32
  }
}

</mosaic_0001>

<llo_original>
// kernel: tpu_custom_call.1
$region0: #{tpu_custom_call.1}
  #allocation0 [shape = 'u32[]', space=smem, size = 0x4, offset = 0x4, fixed_abs, tag = 'smem constant byte address 0x4 - core index']
  #allocation1 [shape = 'u32[144,128]{1,0:T(1,128)}', space=vmem, size = 0x12000, scoped, tag = 'internal scratch']
  #allocation2 [shape = 'f32[256,32]{1,0:T(8,128)}', space=vmem, size = 0x20000, scoped, tag = 'scratch operand']
  %s0 = inlined_call_operand.vmem [shape: f32[256,32], index: 0, kind: input, shape index: {}]
  %s1 = inlined_call_operand.vmem [shape: f32[64,32], index: 1, kind: input, shape index: {}]
  %s2 = inlined_call_operand.vmem [shape: f32[1,64], index: 2, kind: input, shape index: {}]
  %s3 = inlined_call_operand.vmem [shape: f32[64,32], index: 3, kind: input, shape index: {}]
  %s4 = inlined_call_operand.vmem [shape: f32[1,32], index: 4, kind: input, shape index: {}]
  %s5 = inlined_call_operand.vmem [shape: f32[256,32], index: 5, kind: output, shape index: {}]
  %s6 = sld [smem:[#allocation0]]
  $region38: #{tpu_custom_call.1} parent=0
    _
  %s8 = ssub.s32 1, %s6
  %s9 = scalar_select 0, %s8, %s6
  // Predicated region
  $region2: #{tpu_custom_call.1} parent=0 // pred_check
    _
  $region3: #{tpu_custom_call.1} parent=0 // pred_check_branch
    %11 = sbr.rel (0) target = $region5
  $region4: #{tpu_custom_call.1} parent=0 // pred_region
    _
  $region5: #{tpu_custom_call.1} parent=0 // pred_fallthru
    _
  // Predicated region
  $region6: #{tpu_custom_call.1} parent=0 // pred_check
    _
  $region7: #{tpu_custom_call.1} parent=0 // pred_check_branch
    %13 = sbr.rel (0) target = $region9
  $region8: #{tpu_custom_call.1} parent=0 // pred_region
    _
  $region9: #{tpu_custom_call.1} parent=0 // pred_fallthru
    _
  // Predicated region
  $region10: #{tpu_custom_call.1} parent=0 // pred_check
    _
  $region11: #{tpu_custom_call.1} parent=0 // pred_check_branch
    %15 = sbr.rel (0) target = $region13
  $region12: #{tpu_custom_call.1} parent=0 // pred_region
    _
  $region13: #{tpu_custom_call.1} parent=0 // pred_fallthru
    _
  // Predicated region
  $region14: #{tpu_custom_call.1} parent=0 // pred_check
    _
  $region15: #{tpu_custom_call.1} parent=0 // pred_check_branch
    %17 = sbr.rel (0) target = $region17
  $region16: #{tpu_custom_call.1} parent=0 // pred_region
    _
  $region17: #{tpu_custom_call.1} parent=0 // pred_fallthru
    _
  // Predicated region
  $region18: #{tpu_custom_call.1} parent=0 // pred_check
    _
  $region19: #{tpu_custom_call.1} parent=0 // pred_check_branch
    %19 = sbr.rel (0) target = $region21
  $region20: #{tpu_custom_call.1} parent=0 // pred_region
    _
  $region21: #{tpu_custom_call.1} parent=0 // pred_fallthru
    _
  %p20 = scmp.eq.s32.totalorder 0, 0
  // Predicated region
  $region22: #{tpu_custom_call.1} parent=0 // pred_check
    %p21 = pneg %p20
  $region23: #{tpu_custom_call.1} parent=0 // pred_check_branch
    %23 = sbr.rel (%p21) target = $region25
  $region24: #{tpu_custom_call.1} parent=0 // pred_region
    %v24 = vld [vmem:[%s4] sm:$0x1]
    %v26 = vlaneseq
    %v27 = vshrl.u32 %v26, 7
    %v28 = vsub.s32 0, %v27
    %v29 = vrot.slane %v24, %v28
    %vm31 = vcmask 261120
    %32 = vst.msk [vmem:[#allocation2] sm:$0xff] %vm31, %v29
    %33 = vst.msk [vmem:[#allocation2 + $0x8] sm:$0xff] %vm31, %v29
    %34 = vst.msk [vmem:[#allocation2 + $0x10] sm:$0xff] %vm31, %v29
    %35 = vst.msk [vmem:[#allocation2 + $0x18] sm:$0xff] %vm31, %v29
    %36 = vst.msk [vmem:[#allocation2 + $0x20] sm:$0xff] %vm31, %v29
    %37 = vst.msk [vmem:[#allocation2 + $0x28] sm:$0xff] %vm31, %v29
    %38 = vst.msk [vmem:[#allocation2 + $0x30] sm:$0xff] %vm31, %v29
    %39 = vst.msk [vmem:[#allocation2 + $0x38] sm:$0xff] %vm31, %v29
    %40 = vst.msk [vmem:[#allocation2 + $0x40] sm:$0xff] %vm31, %v29
    %41 = vst.msk [vmem:[#allocation2 + $0x48] sm:$0xff] %vm31, %v29
    %42 = vst.msk [vmem:[#allocation2 + $0x50] sm:$0xff] %vm31, %v29
    %43 = vst.msk [vmem:[#allocation2 + $0x58] sm:$0xff] %vm31, %v29
    %44 = vst.msk [vmem:[#allocation2 + $0x60] sm:$0xff] %vm31, %v29
    %45 = vst.msk [vmem:[#allocation2 + $0x68] sm:$0xff] %vm31, %v29
    %46 = vst.msk [vmem:[#allocation2 + $0x70] sm:$0xff] %vm31, %v29
    %47 = vst.msk [vmem:[#allocation2 + $0x78] sm:$0xff] %vm31, %v29
    %48 = vst.msk [vmem:[#allocation2 + $0x80] sm:$0xff] %vm31, %v29
    %49 = vst.msk [vmem:[#allocation2 + $0x88] sm:$0xff] %vm31, %v29
    %50 = vst.msk [vmem:[#allocation2 + $0x90] sm:$0xff] %vm31, %v29
    %51 = vst.msk [vmem:[#allocation2 + $0x98] sm:$0xff] %vm31, %v29
    %52 = vst.msk [vmem:[#allocation2 + $0xa0] sm:$0xff] %vm31, %v29
    %53 = vst.msk [vmem:[#allocation2 + $0xa8] sm:$0xff] %vm31, %v29
    %54 = vst.msk [vmem:[#allocation2 + $0xb0] sm:$0xff] %vm31, %v29
    %55 = vst.msk [vmem:[#allocation2 + $0xb8] sm:$0xff] %vm31, %v29
    %56 = vst.msk [vmem:[#allocation2 + $0xc0] sm:$0xff] %vm31, %v29
    %57 = vst.msk [vmem:[#allocation2 + $0xc8] sm:$0xff] %vm31, %v29
    %58 = vst.msk [vmem:[#allocation2 + $0xd0] sm:$0xff] %vm31, %v29
    %59 = vst.msk [vmem:[#allocation2 + $0xd8] sm:$0xff] %vm31, %v29
    %60 = vst.msk [vmem:[#allocation2 + $0xe0] sm:$0xff] %vm31, %v29
    %61 = vst.msk [vmem:[#allocation2 + $0xe8] sm:$0xff] %vm31, %v29
    %62 = vst.msk [vmem:[#allocation2 + $0xf0] sm:$0xff] %vm31, %v29
    %63 = vst.msk [vmem:[#allocation2 + $0xf8] sm:$0xff] %vm31, %v29
  $region25: #{tpu_custom_call.1} parent=0 // pred_fallthru
    _
  %v64 = vld [vmem:[%s0] sm:$0xff]
  %v65 = vld [vmem:[%s0 + $0x8] sm:$0xff]
  %v66 = vld [vmem:[%s0 + $0x10] sm:$0xff]
  %v67 = vld [vmem:[%s0 + $0x18] sm:$0xff]
  %v68 = vld [vmem:[%s0 + $0x20] sm:$0xff]
  %v69 = vld [vmem:[%s0 + $0x28] sm:$0xff]
  %v70 = vld [vmem:[%s0 + $0x30] sm:$0xff]
  %v71 = vld [vmem:[%s0 + $0x38] sm:$0xff]
  %v72 = vld [vmem:[%s0 + $0x40] sm:$0xff]
  %v73 = vld [vmem:[%s0 + $0x48] sm:$0xff]
  %v74 = vld [vmem:[%s0 + $0x50] sm:$0xff]
  %v75 = vld [vmem:[%s0 + $0x58] sm:$0xff]
  %v76 = vld [vmem:[%s0 + $0x60] sm:$0xff]
  %v77 = vld [vmem:[%s0 + $0x68] sm:$0xff]
  %v78 = vld [vmem:[%s0 + $0x70] sm:$0xff]
  %v79 = vld [vmem:[%s0 + $0x78] sm:$0xff]
  %v80 = vld [vmem:[%s0 + $0x80] sm:$0xff]
  %v81 = vld [vmem:[%s0 + $0x88] sm:$0xff]
  %v82 = vld [vmem:[%s0 + $0x90] sm:$0xff]
  %v83 = vld [vmem:[%s0 + $0x98] sm:$0xff]
  %v84 = vld [vmem:[%s0 + $0xa0] sm:$0xff]
  %v85 = vld [vmem:[%s0 + $0xa8] sm:$0xff]
  %v86 = vld [vmem:[%s0 + $0xb0] sm:$0xff]
  %v87 = vld [vmem:[%s0 + $0xb8] sm:$0xff]
  %v88 = vld [vmem:[%s0 + $0xc0] sm:$0xff]
  %v89 = vld [vmem:[%s0 + $0xc8] sm:$0xff]
  %v90 = vld [vmem:[%s0 + $0xd0] sm:$0xff]
  %v91 = vld [vmem:[%s0 + $0xd8] sm:$0xff]
  %v92 = vld [vmem:[%s0 + $0xe0] sm:$0xff]
  %v93 = vld [vmem:[%s0 + $0xe8] sm:$0xff]
  %v94 = vld [vmem:[%s0 + $0xf0] sm:$0xff]
  %v95 = vld [vmem:[%s0 + $0xf8] sm:$0xff]
  %v96 = vld [vmem:[%s1] sm:$0xff]
  %v97 = vld [vmem:[%s1 + $0x8] sm:$0xff]
  %v98 = vld [vmem:[%s1 + $0x10] sm:$0xff]
  %v99 = vld [vmem:[%s1 + $0x18] sm:$0xff]
  %v100 = vld [vmem:[%s1 + $0x20] sm:$0xff]
  %v101 = vld [vmem:[%s1 + $0x28] sm:$0xff]
  %v102 = vld [vmem:[%s1 + $0x30] sm:$0xff]
  %v103 = vld [vmem:[%s1 + $0x38] sm:$0xff]
  %v104 = vld [vmem:[%s2] sm:$0x1]
  %v106 = vlaneseq
  %v107 = vshrl.u32 %v106, 7
  %v108 = vsub.s32 0, %v107
  %v109 = vrot.slane %v104, %v108
  %vm111 = vcmask 261120
  %v113 = vsel %vm111, %v64, 0
  %v116 = vsel %vm111, %v65, 0
  %v119 = vsel %vm111, %v66, 0
  %v122 = vsel %vm111, %v67, 0
  %v125 = vsel %vm111, %v68, 0
  %v128 = vsel %vm111, %v69, 0
  %v131 = vsel %vm111, %v70, 0
  %v134 = vsel %vm111, %v71, 0
  %v137 = vsel %vm111, %v72, 0
  %v140 = vsel %vm111, %v73, 0
  %v143 = vsel %vm111, %v74, 0
  %v146 = vsel %vm111, %v75, 0
  %v149 = vsel %vm111, %v76, 0
  %v152 = vsel %vm111, %v77, 0
  %v155 = vsel %vm111, %v78, 0
  %v158 = vsel %vm111, %v79, 0
  %v161 = vsel %vm111, %v80, 0
  %v164 = vsel %vm111, %v81, 0
  %v167 = vsel %vm111, %v82, 0
  %v170 = vsel %vm111, %v83, 0
  %v173 = vsel %vm111, %v84, 0
  %v176 = vsel %vm111, %v85, 0
  %v179 = vsel %vm111, %v86, 0
  %v182 = vsel %vm111, %v87, 0
  %v185 = vsel %vm111, %v88, 0
  %v188 = vsel %vm111, %v89, 0
  %v191 = vsel %vm111, %v90, 0
  %v194 = vsel %vm111, %v91, 0
  %v197 = vsel %vm111, %v92, 0
  %v200 = vsel %vm111, %v93, 0
  %v203 = vsel %vm111, %v94, 0
  %v206 = vsel %vm111, %v95, 0
  %v209 = vsel %vm111, %v96, 0
  %v212 = vsel %vm111, %v97, 0
  %v215 = vsel %vm111, %v98, 0
  %v218 = vsel %vm111, %v99, 0
  %v221 = vsel %vm111, %v100, 0
  %v224 = vsel %vm111, %v101, 0
  %v227 = vsel %vm111, %v102, 0
  %v230 = vsel %vm111, %v103, 0
  %232 = vmatprep.subr.mxu0 0.0
  %233 = vmatpush1.xpose.msra.mxu0 0.0
  %234 = vmatprep.subr.mxu0 0.0
  %235 = vmatpush1.xpose.msra.mxu0 0.0
  %236 = vmatprep.subr.mxu0 0.0
  %237 = vmatpush1.xpose.msra.mxu0 0.0
  %238 = vmatprep.subr.mxu0 0.0
  %239 = vmatpush1.xpose.msra.mxu0 0.0
  %240 = vmatprep.subr.mxu0 0.0
  %241 = vmatpush1.xpose.msra.mxu0 0.0
  %242 = vmatprep.subr.mxu0 0.0
  %243 = vmatpush1.xpose.msra.mxu0 0.0
  %244 = vmatprep.subr.mxu0 0.0
  %245 = vmatpush1.xpose.msra.mxu0 0.0
  %246 = vmatprep.subr.mxu0 0.0
  %247 = vmatpush1.xpose.msra.mxu0 0.0
  %248 = vmatprep.subr.mxu0 0.0
  %249 = vmatpush1.xpose.msra.mxu0 %v230
  %250 = vmatprep.subr.mxu0 0.0
  %251 = vmatpush1.xpose.msra.mxu0 %v227
  %252 = vmatprep.subr.mxu0 0.0
  %253 = vmatpush1.xpose.msra.mxu0 %v224
  %254 = vmatprep.subr.mxu0 0.0
  %255 = vmatpush1.xpose.msra.mxu0 %v221
  %256 = vmatprep.subr.mxu0 0.0
  %257 = vmatpush1.xpose.msra.mxu0 %v218
  %258 = vmatprep.subr.mxu0 0.0
  %259 = vmatpush1.xpose.msra.mxu0 %v215
  %260 = vmatprep.subr.mxu0 0.0
  %261 = vmatpush1.xpose.msra.mxu0 %v212
  %262 = vmatprep.subr.mxu0 0.0
  %263 = vmatpush1.xpose.msra.mxu0 %v209
  %264 = vmatprep.subr.mxu0 0.0
  %265 = vmatpush2.xpose.msra.mxu0 0.0
  %266 = vmatprep.subr.mxu0 0.0
  %267 = vmatpush2.xpose.msra.mxu0 0.0
  %268 = vmatprep.subr.mxu0 0.0
  %269 = vmatpush2.xpose.msra.mxu0 0.0
  %270 = vmatprep.subr.mxu0 0.0
  %271 = vmatpush2.xpose.msra.mxu0 0.0
  %272 = vmatprep.subr.mxu0 0.0
  %273 = vmatpush2.xpose.msra.mxu0 0.0
  %274 = vmatprep.subr.mxu0 0.0
  %275 = vmatpush2.xpose.msra.mxu0 0.0
  %276 = vmatprep.subr.mxu0 0.0
  %277 = vmatpush2.xpose.msra.mxu0 0.0
  %278 = vmatprep.subr.mxu0 0.0
  %279 = vmatpush2.xpose.msra.mxu0 0.0
  %280 = vmatprep.subr.mxu0 0.0
  %281 = vmatpush2.xpose.msra.mxu0 0.0
  %282 = vmatprep.subr.mxu0 0.0
  %283 = vmatpush2.xpose.msra.mxu0 0.0
  %284 = vmatprep.subr.mxu0 0.0
  %285 = vmatpush2.xpose.msra.mxu0 0.0
  %286 = vmatprep.subr.mxu0 0.0
  %287 = vmatpush2.xpose.msra.mxu0 0.0
  %288 = vmatprep.subr.mxu0 0.0
  %289 = vmatpush2.xpose.msra.mxu0 0.0
  %290 = vmatprep.subr.mxu0 0.0
  %291 = vmatpush2.xpose.msra.mxu0 0.0
  %292 = vmatprep.subr.mxu0 0.0
  %293 = vmatpush2.xpose.msra.mxu0 0.0
  %294 = vmatprep.subr.mxu0 0.0
  %295 = vmatpush2.xpose.msra.mxu0 0.0
  %296 = vmatprep.mubr.f32.mxu0 0.0
  %297 = vmatmul.mubr.f32.gmra.mxu0 %v113
  %v298 = vpop.f32.mrf.mxu0
  %v299 = vadd.f32 %v109, %v298
  %v300 = vpop.f32.mrf.mxu0
  %301 = vmatprep.mubr.f32.mxu0 0.0
  %302 = vmatmul.mubr.f32.gmra.mxu0 %v116
  %v303 = vpop.f32.mrf.mxu0
  %v304 = vadd.f32 %v109, %v303
  %v305 = vpop.f32.mrf.mxu0
  %306 = vmatprep.mubr.f32.mxu0 0.0
  %307 = vmatmul.mubr.f32.gmra.mxu0 %v119
  %v308 = vpop.f32.mrf.mxu0
  %v309 = vadd.f32 %v109, %v308
  %v310 = vpop.f32.mrf.mxu0
  %311 = vmatprep.mubr.f32.mxu0 0.0
  %312 = vmatmul.mubr.f32.gmra.mxu0 %v122
  %v313 = vpop.f32.mrf.mxu0
  %v314 = vadd.f32 %v109, %v313
  %v315 = vpop.f32.mrf.mxu0
  %316 = vmatprep.mubr.f32.mxu0 0.0
  %317 = vmatmul.mubr.f32.gmra.mxu0 %v125
  %v318 = vpop.f32.mrf.mxu0
  %v319 = vadd.f32 %v109, %v318
  %v320 = vpop.f32.mrf.mxu0
  %321 = vmatprep.mubr.f32.mxu0 0.0
  %322 = vmatmul.mubr.f32.gmra.mxu0 %v128
  %v323 = vpop.f32.mrf.mxu0
  %v324 = vadd.f32 %v109, %v323
  %v325 = vpop.f32.mrf.mxu0
  %326 = vmatprep.mubr.f32.mxu0 0.0
  %327 = vmatmul.mubr.f32.gmra.mxu0 %v131
  %v328 = vpop.f32.mrf.mxu0
  %v329 = vadd.f32 %v109, %v328
  %v330 = vpop.f32.mrf.mxu0
  %331 = vmatprep.mubr.f32.mxu0 0.0
  %332 = vmatmul.mubr.f32.gmra.mxu0 %v134
  %v333 = vpop.f32.mrf.mxu0
  %v334 = vadd.f32 %v109, %v333
  %v335 = vpop.f32.mrf.mxu0
  %336 = vmatprep.mubr.f32.mxu0 0.0
  %337 = vmatmul.mubr.f32.gmra.mxu0 %v137
  %v338 = vpop.f32.mrf.mxu0
  %v339 = vadd.f32 %v109, %v338
  %v340 = vpop.f32.mrf.mxu0
  %341 = vmatprep.mubr.f32.mxu0 0.0
  %342 = vmatmul.mubr.f32.gmra.mxu0 %v140
  %v343 = vpop.f32.mrf.mxu0
  %v344 = vadd.f32 %v109, %v343
  %v345 = vpop.f32.mrf.mxu0
  %346 = vmatprep.mubr.f32.mxu0 0.0
  %347 = vmatmul.mubr.f32.gmra.mxu0 %v143
  %v348 = vpop.f32.mrf.mxu0
  %v349 = vadd.f32 %v109, %v348
  %v350 = vpop.f32.mrf.mxu0
  %351 = vmatprep.mubr.f32.mxu0 0.0
  %352 = vmatmul.mubr.f32.gmra.mxu0 %v146
  %v353 = vpop.f32.mrf.mxu0
  %v354 = vadd.f32 %v109, %v353
  %v355 = vpop.f32.mrf.mxu0
  %356 = vmatprep.mubr.f32.mxu0 0.0
  %357 = vmatmul.mubr.f32.gmra.mxu0 %v149
  %v358 = vpop.f32.mrf.mxu0
  %v359 = vadd.f32 %v109, %v358
  %v360 = vpop.f32.mrf.mxu0
  %361 = vmatprep.mubr.f32.mxu0 0.0
  %362 = vmatmul.mubr.f32.gmra.mxu0 %v152
  %v363 = vpop.f32.mrf.mxu0
  %v364 = vadd.f32 %v109, %v363
  %v365 = vpop.f32.mrf.mxu0
  %366 = vmatprep.mubr.f32.mxu0 0.0
  %367 = vmatmul.mubr.f32.gmra.mxu0 %v155
  %v368 = vpop.f32.mrf.mxu0
  %v369 = vadd.f32 %v109, %v368
  %v370 = vpop.f32.mrf.mxu0
  %371 = vmatprep.mubr.f32.mxu0 0.0
  %372 = vmatmul.mubr.f32.gmra.mxu0 %v158
  %v373 = vpop.f32.mrf.mxu0
  %v374 = vadd.f32 %v109, %v373
  %v375 = vpop.f32.mrf.mxu0
  %376 = vmatprep.mubr.f32.mxu0 0.0
  %377 = vmatmul.mubr.f32.gmra.mxu0 %v161
  %v378 = vpop.f32.mrf.mxu0
  %v379 = vadd.f32 %v109, %v378
  %v380 = vpop.f32.mrf.mxu0
  %381 = vmatprep.mubr.f32.mxu0 0.0
  %382 = vmatmul.mubr.f32.gmra.mxu0 %v164
  %v383 = vpop.f32.mrf.mxu0
  %v384 = vadd.f32 %v109, %v383
  %v385 = vpop.f32.mrf.mxu0
  %386 = vmatprep.mubr.f32.mxu0 0.0
  %387 = vmatmul.mubr.f32.gmra.mxu0 %v167
  %v388 = vpop.f32.mrf.mxu0
  %v389 = vadd.f32 %v109, %v388
  %v390 = vpop.f32.mrf.mxu0
  %391 = vmatprep.mubr.f32.mxu0 0.0
  %392 = vmatmul.mubr.f32.gmra.mxu0 %v170
  %v393 = vpop.f32.mrf.mxu0
  %v394 = vadd.f32 %v109, %v393
  %v395 = vpop.f32.mrf.mxu0
  %396 = vmatprep.mubr.f32.mxu0 0.0
  %397 = vmatmul.mubr.f32.gmra.mxu0 %v173
  %v398 = vpop.f32.mrf.mxu0
  %v399 = vadd.f32 %v109, %v398
  %v400 = vpop.f32.mrf.mxu0
  %401 = vmatprep.mubr.f32.mxu0 0.0
  %402 = vmatmul.mubr.f32.gmra.mxu0 %v176
  %v403 = vpop.f32.mrf.mxu0
  %v404 = vadd.f32 %v109, %v403
  %v405 = vpop.f32.mrf.mxu0
  %406 = vmatprep.mubr.f32.mxu0 0.0
  %407 = vmatmul.mubr.f32.gmra.mxu0 %v179
  %v408 = vpop.f32.mrf.mxu0
  %v409 = vadd.f32 %v109, %v408
  %v410 = vpop.f32.mrf.mxu0
  %411 = vmatprep.mubr.f32.mxu0 0.0
  %412 = vmatmul.mubr.f32.gmra.mxu0 %v182
  %v413 = vpop.f32.mrf.mxu0
  %v414 = vadd.f32 %v109, %v413
  %v415 = vpop.f32.mrf.mxu0
  %416 = vmatprep.mubr.f32.mxu0 0.0
  %417 = vmatmul.mubr.f32.gmra.mxu0 %v185
  %v418 = vpop.f32.mrf.mxu0
  %v419 = vadd.f32 %v109, %v418
  %v420 = vpop.f32.mrf.mxu0
  %421 = vmatprep.mubr.f32.mxu0 0.0
  %422 = vmatmul.mubr.f32.gmra.mxu0 %v188
  %v423 = vpop.f32.mrf.mxu0
  %v424 = vadd.f32 %v109, %v423
  %v425 = vpop.f32.mrf.mxu0
  %426 = vmatprep.mubr.f32.mxu0 0.0
  %427 = vmatmul.mubr.f32.gmra.mxu0 %v191
  %v428 = vpop.f32.mrf.mxu0
  %v429 = vadd.f32 %v109, %v428
  %v430 = vpop.f32.mrf.mxu0
  %431 = vmatprep.mubr.f32.mxu0 0.0
  %432 = vmatmul.mubr.f32.gmra.mxu0 %v194
  %v433 = vpop.f32.mrf.mxu0
  %v434 = vadd.f32 %v109, %v433
  %v435 = vpop.f32.mrf.mxu0
  %436 = vmatprep.mubr.f32.mxu0 0.0
  %437 = vmatmul.mubr.f32.gmra.mxu0 %v197
  %v438 = vpop.f32.mrf.mxu0
  %v439 = vadd.f32 %v109, %v438
  %v440 = vpop.f32.mrf.mxu0
  %441 = vmatprep.mubr.f32.mxu0 0.0
  %442 = vmatmul.mubr.f32.gmra.mxu0 %v200
  %v443 = vpop.f32.mrf.mxu0
  %v444 = vadd.f32 %v109, %v443
  %v445 = vpop.f32.mrf.mxu0
  %446 = vmatprep.mubr.f32.mxu0 0.0
  %447 = vmatmul.mubr.f32.gmra.mxu0 %v203
  %v448 = vpop.f32.mrf.mxu0
  %v449 = vadd.f32 %v109, %v448
  %v450 = vpop.f32.mrf.mxu0
  %451 = vmatprep.mubr.f32.mxu0 0.0
  %452 = vmatmul.mubr.f32.gmra.mxu0 %v206
  %v453 = vpop.f32.mrf.mxu0
  %v454 = vadd.f32 %v109, %v453
  %v455 = vpop.f32.mrf.mxu0
  %456 = vdwg.mxu0
  %v457 = vmul.f32 %v299, 0.5
  %v458 = vmul.f32 %v304, 0.5
  %v459 = vmul.f32 %v309, 0.5
  %v460 = vmul.f32 %v314, 0.5
  %v461 = vmul.f32 %v319, 0.5
  %v462 = vmul.f32 %v324, 0.5
  %v463 = vmul.f32 %v329, 0.5
  %v464 = vmul.f32 %v334, 0.5
  %v465 = vmul.f32 %v339, 0.5
  %v466 = vmul.f32 %v344, 0.5
  %v467 = vmul.f32 %v349, 0.5
  %v468 = vmul.f32 %v354, 0.5
  %v469 = vmul.f32 %v359, 0.5
  %v470 = vmul.f32 %v364, 0.5
  %v471 = vmul.f32 %v369, 0.5
  %v472 = vmul.f32 %v374, 0.5
  %v473 = vmul.f32 %v379, 0.5
  %v474 = vmul.f32 %v384, 0.5
  %v475 = vmul.f32 %v389, 0.5
  %v476 = vmul.f32 %v394, 0.5
  %v477 = vmul.f32 %v399, 0.5
  %v478 = vmul.f32 %v404, 0.5
  %v479 = vmul.f32 %v409, 0.5
  %v480 = vmul.f32 %v414, 0.5
  %v481 = vmul.f32 %v419, 0.5
  %v482 = vmul.f32 %v424, 0.5
  %v483 = vmul.f32 %v429, 0.5
  %v484 = vmul.f32 %v434, 0.5
  %v485 = vmul.f32 %v439, 0.5
  %v486 = vmul.f32 %v444, 0.5
  %v487 = vmul.f32 %v449, 0.5
  %v488 = vmul.f32 %v454, 0.5
  %v489 = vmul.f32 %v299, 0.70710677
  %v490 = vmul.f32 %v304, 0.70710677
  %v491 = vmul.f32 %v309, 0.70710677
  %v492 = vmul.f32 %v314, 0.70710677
  %v493 = vmul.f32 %v319, 0.70710677
  %v494 = vmul.f32 %v324, 0.70710677
  %v495 = vmul.f32 %v329, 0.70710677
  %v496 = vmul.f32 %v334, 0.70710677
  %v497 = vmul.f32 %v339, 0.70710677
  %v498 = vmul.f32 %v344, 0.70710677
  %v499 = vmul.f32 %v349, 0.70710677
  %v500 = vmul.f32 %v354, 0.70710677
  %v501 = vmul.f32 %v359, 0.70710677
  %v502 = vmul.f32 %v364, 0.70710677
  %v503 = vmul.f32 %v369, 0.70710677
  %v504 = vmul.f32 %v374, 0.70710677
  %v505 = vmul.f32 %v379, 0.70710677
  %v506 = vmul.f32 %v384, 0.70710677
  %v507 = vmul.f32 %v389, 0.70710677
  %v508 = vmul.f32 %v394, 0.70710677
  %v509 = vmul.f32 %v399, 0.70710677
  %v510 = vmul.f32 %v404, 0.70710677
  %v511 = vmul.f32 %v409, 0.70710677
  %v512 = vmul.f32 %v414, 0.70710677
  %v513 = vmul.f32 %v419, 0.70710677
  %v514 = vmul.f32 %v424, 0.70710677
  %v515 = vmul.f32 %v429, 0.70710677
  %v516 = vmul.f32 %v434, 0.70710677
  %v517 = vmul.f32 %v439, 0.70710677
  %v518 = vmul.f32 %v444, 0.70710677
  %v519 = vmul.f32 %v449, 0.70710677
  %v520 = vmul.f32 %v454, 0.70710677
  %v521 = verf.f32.pop %v489
  %v522 = verf.f32.pop %v490
  %v523 = verf.f32.pop %v491
  %v524 = verf.f32.pop %v492
  %v525 = verf.f32.pop %v493
  %v526 = verf.f32.pop %v494
  %v527 = verf.f32.pop %v495
  %v528 = verf.f32.pop %v496
  %v529 = verf.f32.pop %v497
  %v530 = verf.f32.pop %v498
  %v531 = verf.f32.pop %v499
  %v532 = verf.f32.pop %v500
  %v533 = verf.f32.pop %v501
  %v534 = verf.f32.pop %v502
  %v535 = verf.f32.pop %v503
  %v536 = verf.f32.pop %v504
  %v537 = verf.f32.pop %v505
  %v538 = verf.f32.pop %v506
  %v539 = verf.f32.pop %v507
  %v540 = verf.f32.pop %v508
  %v541 = verf.f32.pop %v509
  %v542 = verf.f32.pop %v510
  %v543 = verf.f32.pop %v511
  %v544 = verf.f32.pop %v512
  %v545 = verf.f32.pop %v513
  %v546 = verf.f32.pop %v514
  %v547 = verf.f32.pop %v515
  %v548 = verf.f32.pop %v516
  %v549 = verf.f32.pop %v517
  %v550 = verf.f32.pop %v518
  %v551 = verf.f32.pop %v519
  %v552 = verf.f32.pop %v520
  %v553 = vadd.f32 %v521, 1.0
  %v554 = vadd.f32 %v522, 1.0
  %v555 = vadd.f32 %v523, 1.0
  %v556 = vadd.f32 %v524, 1.0
  %v557 = vadd.f32 %v525, 1.0
  %v558 = vadd.f32 %v526, 1.0
  %v559 = vadd.f32 %v527, 1.0
  %v560 = vadd.f32 %v528, 1.0
  %v561 = vadd.f32 %v529, 1.0
  %v562 = vadd.f32 %v530, 1.0
  %v563 = vadd.f32 %v531, 1.0
  %v564 = vadd.f32 %v532, 1.0
  %v565 = vadd.f32 %v533, 1.0
  %v566 = vadd.f32 %v534, 1.0
  %v567 = vadd.f32 %v535, 1.0
  %v568 = vadd.f32 %v536, 1.0
  %v569 = vadd.f32 %v537, 1.0
  %v570 = vadd.f32 %v538, 1.0
  %v571 = vadd.f32 %v539, 1.0
  %v572 = vadd.f32 %v540, 1.0
  %v573 = vadd.f32 %v541, 1.0
  %v574 = vadd.f32 %v542, 1.0
  %v575 = vadd.f32 %v543, 1.0
  %v576 = vadd.f32 %v544, 1.0
  %v577 = vadd.f32 %v545, 1.0
  %v578 = vadd.f32 %v546, 1.0
  %v579 = vadd.f32 %v547, 1.0
  %v580 = vadd.f32 %v548, 1.0
  %v581 = vadd.f32 %v549, 1.0
  %v582 = vadd.f32 %v550, 1.0
  %v583 = vadd.f32 %v551, 1.0
  %v584 = vadd.f32 %v552, 1.0
  %v585 = vmul.f32 %v457, %v553
  %v586 = vmul.f32 %v458, %v554
  %v587 = vmul.f32 %v459, %v555
  %v588 = vmul.f32 %v460, %v556
  %v589 = vmul.f32 %v461, %v557
  %v590 = vmul.f32 %v462, %v558
  %v591 = vmul.f32 %v463, %v559
  %v592 = vmul.f32 %v464, %v560
  %v593 = vmul.f32 %v465, %v561
  %v594 = vmul.f32 %v466, %v562
  %v595 = vmul.f32 %v467, %v563
  %v596 = vmul.f32 %v468, %v564
  %v597 = vmul.f32 %v469, %v565
  %v598 = vmul.f32 %v470, %v566
  %v599 = vmul.f32 %v471, %v567
  %v600 = vmul.f32 %v472, %v568
  %v601 = vmul.f32 %v473, %v569
  %v602 = vmul.f32 %v474, %v570
  %v603 = vmul.f32 %v475, %v571
  %v604 = vmul.f32 %v476, %v572
  %v605 = vmul.f32 %v477, %v573
  %v606 = vmul.f32 %v478, %v574
  %v607 = vmul.f32 %v479, %v575
  %v608 = vmul.f32 %v480, %v576
  %v609 = vmul.f32 %v481, %v577
  %v610 = vmul.f32 %v482, %v578
  %v611 = vmul.f32 %v483, %v579
  %v612 = vmul.f32 %v484, %v580
  %v613 = vmul.f32 %v485, %v581
  %v614 = vmul.f32 %v486, %v582
  %v615 = vmul.f32 %v487, %v583
  %v616 = vmul.f32 %v488, %v584
  %v617 = vld [vmem:[#allocation2] sm:$0xff]
  %v618 = vld [vmem:[#allocation2 + $0x8] sm:$0xff]
  %v619 = vld [vmem:[#allocation2 + $0x10] sm:$0xff]
  %v620 = vld [vmem:[#allocation2 + $0x18] sm:$0xff]
  %v621 = vld [vmem:[#allocation2 + $0x20] sm:$0xff]
  %v622 = vld [vmem:[#allocation2 + $0x28] sm:$0xff]
  %v623 = vld [vmem:[#allocation2 + $0x30] sm:$0xff]
  %v624 = vld [vmem:[#allocation2 + $0x38] sm:$0xff]
  %v625 = vld [vmem:[#allocation2 + $0x40] sm:$0xff]
  %v626 = vld [vmem:[#allocation2 + $0x48] sm:$0xff]
  %v627 = vld [vmem:[#allocation2 + $0x50] sm:$0xff]
  %v628 = vld [vmem:[#allocation2 + $0x58] sm:$0xff]
  %v629 = vld [vmem:[#allocation2 + $0x60] sm:$0xff]
  %v630 = vld [vmem:[#allocation2 + $0x68] sm:$0xff]
  %v631 = vld [vmem:[#allocation2 + $0x70] sm:$0xff]
  %v632 = vld [vmem:[#allocation2 + $0x78] sm:$0xff]
  %v633 = vld [vmem:[#allocation2 + $0x80] sm:$0xff]
  %v634 = vld [vmem:[#allocation2 + $0x88] sm:$0xff]
  %v635 = vld [vmem:[#allocation2 + $0x90] sm:$0xff]
  %v636 = vld [vmem:[#allocation2 + $0x98] sm:$0xff]
  %v637 = vld [vmem:[#allocation2 + $0xa0] sm:$0xff]
  %v638 = vld [vmem:[#allocation2 + $0xa8] sm:$0xff]
  %v639 = vld [vmem:[#allocation2 + $0xb0] sm:$0xff]
  %v640 = vld [vmem:[#allocation2 + $0xb8] sm:$0xff]
  %v641 = vld [vmem:[#allocation2 + $0xc0] sm:$0xff]
  %v642 = vld [vmem:[#allocation2 + $0xc8] sm:$0xff]
  %v643 = vld [vmem:[#allocation2 + $0xd0] sm:$0xff]
  %v644 = vld [vmem:[#allocation2 + $0xd8] sm:$0xff]
  %v645 = vld [vmem:[#allocation2 + $0xe0] sm:$0xff]
  %v646 = vld [vmem:[#allocation2 + $0xe8] sm:$0xff]
  %v647 = vld [vmem:[#allocation2 + $0xf0] sm:$0xff]
  %v648 = vld [vmem:[#allocation2 + $0xf8] sm:$0xff]
  %v649 = vld [vmem:[%s3] sm:$0xff]
  %v650 = vld [vmem:[%s3 + $0x8] sm:$0xff]
  %v651 = vld [vmem:[%s3 + $0x10] sm:$0xff]
  %v652 = vld [vmem:[%s3 + $0x18] sm:$0xff]
  %v653 = vld [vmem:[%s3 + $0x20] sm:$0xff]
  %v654 = vld [vmem:[%s3 + $0x28] sm:$0xff]
  %v655 = vld [vmem:[%s3 + $0x30] sm:$0xff]
  %v656 = vld [vmem:[%s3 + $0x38] sm:$0xff]
  %vm657 = vcmask 523264
  %v659 = vsel %vm657, %v585, 0
  %v662 = vsel %vm657, %v586, 0
  %v665 = vsel %vm657, %v587, 0
  %v668 = vsel %vm657, %v588, 0
  %v671 = vsel %vm657, %v589, 0
  %v674 = vsel %vm657, %v590, 0
  %v677 = vsel %vm657, %v591, 0
  %v680 = vsel %vm657, %v592, 0
  %v683 = vsel %vm657, %v593, 0
  %v686 = vsel %vm657, %v594, 0
  %v689 = vsel %vm657, %v595, 0
  %v692 = vsel %vm657, %v596, 0
  %v695 = vsel %vm657, %v597, 0
  %v698 = vsel %vm657, %v598, 0
  %v701 = vsel %vm657, %v599, 0
  %v704 = vsel %vm657, %v600, 0
  %v707 = vsel %vm657, %v601, 0
  %v710 = vsel %vm657, %v602, 0
  %v713 = vsel %vm657, %v603, 0
  %v716 = vsel %vm657, %v604, 0
  %v719 = vsel %vm657, %v605, 0
  %v722 = vsel %vm657, %v606, 0
  %v725 = vsel %vm657, %v607, 0
  %v728 = vsel %vm657, %v608, 0
  %v731 = vsel %vm657, %v609, 0
  %v734 = vsel %vm657, %v610, 0
  %v737 = vsel %vm657, %v611, 0
  %v740 = vsel %vm657, %v612, 0
  %v743 = vsel %vm657, %v613, 0
  %v746 = vsel %vm657, %v614, 0
  %v749 = vsel %vm657, %v615, 0
  %v752 = vsel %vm657, %v616, 0
  %754 = vmatprep.subr.mxu0 0.0
  %755 = vmatpush1.msra.mxu0 0.0
  %756 = vmatprep.subr.mxu0 0.0
  %757 = vmatpush1.msra.mxu0 0.0
  %758 = vmatprep.subr.mxu0 0.0
  %759 = vmatpush1.msra.mxu0 0.0
  %760 = vmatprep.subr.mxu0 0.0
  %761 = vmatpush1.msra.mxu0 0.0
  %762 = vmatprep.subr.mxu0 0.0
  %763 = vmatpush1.msra.mxu0 0.0
  %764 = vmatprep.subr.mxu0 0.0
  %765 = vmatpush1.msra.mxu0 0.0
  %766 = vmatprep.subr.mxu0 0.0
  %767 = vmatpush1.msra.mxu0 0.0
  %768 = vmatprep.subr.mxu0 0.0
  %769 = vmatpush1.msra.mxu0 0.0
  %770 = vmatprep.subr.mxu0 0.0
  %771 = vmatpush1.msra.mxu0 %v656
  %772 = vmatprep.subr.mxu0 0.0
  %773 = vmatpush1.msra.mxu0 %v655
  %774 = vmatprep.subr.mxu0 0.0
  %775 = vmatpush1.msra.mxu0 %v654
  %776 = vmatprep.subr.mxu0 0.0
  %777 = vmatpush1.msra.mxu0 %v653
  %778 = vmatprep.subr.mxu0 0.0
  %779 = vmatpush1.msra.mxu0 %v652
  %780 = vmatprep.subr.mxu0 0.0
  %781 = vmatpush1.msra.mxu0 %v651
  %782 = vmatprep.subr.mxu0 0.0
  %783 = vmatpush1.msra.mxu0 %v650
  %784 = vmatprep.subr.mxu0 0.0
  %785 = vmatpush1.msra.mxu0 %v649
  %786 = vmatprep.subr.mxu0 0.0
  %787 = vmatpush2.msra.mxu0 0.0
  %788 = vmatprep.subr.mxu0 0.0
  %789 = vmatpush2.msra.mxu0 0.0
  %790 = vmatprep.subr.mxu0 0.0
  %791 = vmatpush2.msra.mxu0 0.0
  %792 = vmatprep.subr.mxu0 0.0
  %793 = vmatpush2.msra.mxu0 0.0
  %794 = vmatprep.subr.mxu0 0.0
  %795 = vmatpush2.msra.mxu0 0.0
  %796 = vmatprep.subr.mxu0 0.0
  %797 = vmatpush2.msra.mxu0 0.0
  %798 = vmatprep.subr.mxu0 0.0
  %799 = vmatpush2.msra.mxu0 0.0
  %800 = vmatprep.subr.mxu0 0.0
  %801 = vmatpush2.msra.mxu0 0.0
  %802 = vmatprep.subr.mxu0 0.0
  %803 = vmatpush2.msra.mxu0 0.0
  %804 = vmatprep.subr.mxu0 0.0
  %805 = vmatpush2.msra.mxu0 0.0
  %806 = vmatprep.subr.mxu0 0.0
  %807 = vmatpush2.msra.mxu0 0.0
  %808 = vmatprep.subr.mxu0 0.0
  %809 = vmatpush2.msra.mxu0 0.0
  %810 = vmatprep.subr.mxu0 0.0
  %811 = vmatpush2.msra.mxu0 0.0
  %812 = vmatprep.subr.mxu0 0.0
  %813 = vmatpush2.msra.mxu0 0.0
  %814 = vmatprep.subr.mxu0 0.0
  %815 = vmatpush2.msra.mxu0 0.0
  %816 = vmatprep.subr.mxu0 0.0
  %817 = vmatpush2.msra.mxu0 0.0
  %818 = vmatprep.mubr.f32.mxu0 0.0
  %819 = vmatmul.mubr.f32.gmra.mxu0 %v659
  %v820 = vpop.f32.mrf.mxu0
  %v821 = vadd.f32 0.0, %v820
  %v822 = vpop.f32.mrf.mxu0
  %823 = vmatprep.mubr.f32.mxu0 0.0
  %824 = vmatmul.mubr.f32.gmra.mxu0 %v662
  %v825 = vpop.f32.mrf.mxu0
  %v826 = vadd.f32 0.0, %v825
  %v827 = vpop.f32.mrf.mxu0
  %828 = vmatprep.mubr.f32.mxu0 0.0
  %829 = vmatmul.mubr.f32.gmra.mxu0 %v665
  %v830 = vpop.f32.mrf.mxu0
  %v831 = vadd.f32 0.0, %v830
  %v832 = vpop.f32.mrf.mxu0
  %833 = vmatprep.mubr.f32.mxu0 0.0
  %834 = vmatmul.mubr.f32.gmra.mxu0 %v668
  %v835 = vpop.f32.mrf.mxu0
  %v836 = vadd.f32 0.0, %v835
  %v837 = vpop.f32.mrf.mxu0
  %838 = vmatprep.mubr.f32.mxu0 0.0
  %839 = vmatmul.mubr.f32.gmra.mxu0 %v671
  %v840 = vpop.f32.mrf.mxu0
  %v841 = vadd.f32 0.0, %v840
  %v842 = vpop.f32.mrf.mxu0
  %843 = vmatprep.mubr.f32.mxu0 0.0
  %844 = vmatmul.mubr.f32.gmra.mxu0 %v674
  %v845 = vpop.f32.mrf.mxu0
  %v846 = vadd.f32 0.0, %v845
  %v847 = vpop.f32.mrf.mxu0
  %848 = vmatprep.mubr.f32.mxu0 0.0
  %849 = vmatmul.mubr.f32.gmra.mxu0 %v677
  %v850 = vpop.f32.mrf.mxu0
  %v851 = vadd.f32 0.0, %v850
  %v852 = vpop.f32.mrf.mxu0
  %853 = vmatprep.mubr.f32.mxu0 0.0
  %854 = vmatmul.mubr.f32.gmra.mxu0 %v680
  %v855 = vpop.f32.mrf.mxu0
  %v856 = vadd.f32 0.0, %v855
  %v857 = vpop.f32.mrf.mxu0
  %858 = vmatprep.mubr.f32.mxu0 0.0
  %859 = vmatmul.mubr.f32.gmra.mxu0 %v683
  %v860 = vpop.f32.mrf.mxu0
  %v861 = vadd.f32 0.0, %v860
  %v862 = vpop.f32.mrf.mxu0
  %863 = vmatprep.mubr.f32.mxu0 0.0
  %864 = vmatmul.mubr.f32.gmra.mxu0 %v686
  %v865 = vpop.f32.mrf.mxu0
  %v866 = vadd.f32 0.0, %v865
  %v867 = vpop.f32.mrf.mxu0
  %868 = vmatprep.mubr.f32.mxu0 0.0
  %869 = vmatmul.mubr.f32.gmra.mxu0 %v689
  %v870 = vpop.f32.mrf.mxu0
  %v871 = vadd.f32 0.0, %v870
  %v872 = vpop.f32.mrf.mxu0
  %873 = vmatprep.mubr.f32.mxu0 0.0
  %874 = vmatmul.mubr.f32.gmra.mxu0 %v692
  %v875 = vpop.f32.mrf.mxu0
  %v876 = vadd.f32 0.0, %v875
  %v877 = vpop.f32.mrf.mxu0
  %878 = vmatprep.mubr.f32.mxu0 0.0
  %879 = vmatmul.mubr.f32.gmra.mxu0 %v695
  %v880 = vpop.f32.mrf.mxu0
  %v881 = vadd.f32 0.0, %v880
  %v882 = vpop.f32.mrf.mxu0
  %883 = vmatprep.mubr.f32.mxu0 0.0
  %884 = vmatmul.mubr.f32.gmra.mxu0 %v698
  %v885 = vpop.f32.mrf.mxu0
  %v886 = vadd.f32 0.0, %v885
  %v887 = vpop.f32.mrf.mxu0
  %888 = vmatprep.mubr.f32.mxu0 0.0
  %889 = vmatmul.mubr.f32.gmra.mxu0 %v701
  %v890 = vpop.f32.mrf.mxu0
  %v891 = vadd.f32 0.0, %v890
  %v892 = vpop.f32.mrf.mxu0
  %893 = vmatprep.mubr.f32.mxu0 0.0
  %894 = vmatmul.mubr.f32.gmra.mxu0 %v704
  %v895 = vpop.f32.mrf.mxu0
  %v896 = vadd.f32 0.0, %v895
  %v897 = vpop.f32.mrf.mxu0
  %898 = vmatprep.mubr.f32.mxu0 0.0
  %899 = vmatmul.mubr.f32.gmra.mxu0 %v707
  %v900 = vpop.f32.mrf.mxu0
  %v901 = vadd.f32 0.0, %v900
  %v902 = vpop.f32.mrf.mxu0
  %903 = vmatprep.mubr.f32.mxu0 0.0
  %904 = vmatmul.mubr.f32.gmra.mxu0 %v710
  %v905 = vpop.f32.mrf.mxu0
  %v906 = vadd.f32 0.0, %v905
  %v907 = vpop.f32.mrf.mxu0
  %908 = vmatprep.mubr.f32.mxu0 0.0
  %909 = vmatmul.mubr.f32.gmra.mxu0 %v713
  %v910 = vpop.f32.mrf.mxu0
  %v911 = vadd.f32 0.0, %v910
  %v912 = vpop.f32.mrf.mxu0
  %913 = vmatprep.mubr.f32.mxu0 0.0
  %914 = vmatmul.mubr.f32.gmra.mxu0 %v716
  %v915 = vpop.f32.mrf.mxu0
  %v916 = vadd.f32 0.0, %v915
  %v917 = vpop.f32.mrf.mxu0
  %918 = vmatprep.mubr.f32.mxu0 0.0
  %919 = vmatmul.mubr.f32.gmra.mxu0 %v719
  %v920 = vpop.f32.mrf.mxu0
  %v921 = vadd.f32 0.0, %v920
  %v922 = vpop.f32.mrf.mxu0
  %923 = vmatprep.mubr.f32.mxu0 0.0
  %924 = vmatmul.mubr.f32.gmra.mxu0 %v722
  %v925 = vpop.f32.mrf.mxu0
  %v926 = vadd.f32 0.0, %v925
  %v927 = vpop.f32.mrf.mxu0
  %928 = vmatprep.mubr.f32.mxu0 0.0
  %929 = vmatmul.mubr.f32.gmra.mxu0 %v725
  %v930 = vpop.f32.mrf.mxu0
  %v931 = vadd.f32 0.0, %v930
  %v932 = vpop.f32.mrf.mxu0
  %933 = vmatprep.mubr.f32.mxu0 0.0
  %934 = vmatmul.mubr.f32.gmra.mxu0 %v728
  %v935 = vpop.f32.mrf.mxu0
  %v936 = vadd.f32 0.0, %v935
  %v937 = vpop.f32.mrf.mxu0
  %938 = vmatprep.mubr.f32.mxu0 0.0
  %939 = vmatmul.mubr.f32.gmra.mxu0 %v731
  %v940 = vpop.f32.mrf.mxu0
  %v941 = vadd.f32 0.0, %v940
  %v942 = vpop.f32.mrf.mxu0
  %943 = vmatprep.mubr.f32.mxu0 0.0
  %944 = vmatmul.mubr.f32.gmra.mxu0 %v734
  %v945 = vpop.f32.mrf.mxu0
  %v946 = vadd.f32 0.0, %v945
  %v947 = vpop.f32.mrf.mxu0
  %948 = vmatprep.mubr.f32.mxu0 0.0
  %949 = vmatmul.mubr.f32.gmra.mxu0 %v737
  %v950 = vpop.f32.mrf.mxu0
  %v951 = vadd.f32 0.0, %v950
  %v952 = vpop.f32.mrf.mxu0
  %953 = vmatprep.mubr.f32.mxu0 0.0
  %954 = vmatmul.mubr.f32.gmra.mxu0 %v740
  %v955 = vpop.f32.mrf.mxu0
  %v956 = vadd.f32 0.0, %v955
  %v957 = vpop.f32.mrf.mxu0
  %958 = vmatprep.mubr.f32.mxu0 0.0
  %959 = vmatmul.mubr.f32.gmra.mxu0 %v743
  %v960 = vpop.f32.mrf.mxu0
  %v961 = vadd.f32 0.0, %v960
  %v962 = vpop.f32.mrf.mxu0
  %963 = vmatprep.mubr.f32.mxu0 0.0
  %964 = vmatmul.mubr.f32.gmra.mxu0 %v746
  %v965 = vpop.f32.mrf.mxu0
  %v966 = vadd.f32 0.0, %v965
  %v967 = vpop.f32.mrf.mxu0
  %968 = vmatprep.mubr.f32.mxu0 0.0
  %969 = vmatmul.mubr.f32.gmra.mxu0 %v749
  %v970 = vpop.f32.mrf.mxu0
  %v971 = vadd.f32 0.0, %v970
  %v972 = vpop.f32.mrf.mxu0
  %973 = vmatprep.mubr.f32.mxu0 0.0
  %974 = vmatmul.mubr.f32.gmra.mxu0 %v752
  %v975 = vpop.f32.mrf.mxu0
  %v976 = vadd.f32 0.0, %v975
  %v977 = vpop.f32.mrf.mxu0
  %978 = vdwg.mxu0
  %v979 = vadd.f32 %v617, %v821
  %v980 = vadd.f32 %v618, %v826
  %v981 = vadd.f32 %v619, %v831
  %v982 = vadd.f32 %v620, %v836
  %v983 = vadd.f32 %v621, %v841
  %v984 = vadd.f32 %v622, %v846
  %v985 = vadd.f32 %v623, %v851
  %v986 = vadd.f32 %v624, %v856
  %v987 = vadd.f32 %v625, %v861
  %v988 = vadd.f32 %v626, %v866
  %v989 = vadd.f32 %v627, %v871
  %v990 = vadd.f32 %v628, %v876
  %v991 = vadd.f32 %v629, %v881
  %v992 = vadd.f32 %v630, %v886
  %v993 = vadd.f32 %v631, %v891
  %v994 = vadd.f32 %v632, %v896
  %v995 = vadd.f32 %v633, %v901
  %v996 = vadd.f32 %v634, %v906
  %v997 = vadd.f32 %v635, %v911
  %v998 = vadd.f32 %v636, %v916
  %v999 = vadd.f32 %v637, %v921
  %v1000 = vadd.f32 %v638, %v926
  %v1001 = vadd.f32 %v639, %v931
  %v1002 = vadd.f32 %v640, %v936
  %v1003 = vadd.f32 %v641, %v941
  %v1004 = vadd.f32 %v642, %v946
  %v1005 = vadd.f32 %v643, %v951
  %v1006 = vadd.f32 %v644, %v956
  %v1007 = vadd.f32 %v645, %v961
  %v1008 = vadd.f32 %v646, %v966
  %v1009 = vadd.f32 %v647, %v971
  %v1010 = vadd.f32 %v648, %v976
  %1011 = vst.msk [vmem:[#allocation2] sm:$0xff] %vm111, %v979
  %1012 = vst.msk [vmem:[#allocation2 + $0x8] sm:$0xff] %vm111, %v980
  %1013 = vst.msk [vmem:[#allocation2 + $0x10] sm:$0xff] %vm111, %v981
  %1014 = vst.msk [vmem:[#allocation2 + $0x18] sm:$0xff] %vm111, %v982
  %1015 = vst.msk [vmem:[#allocation2 + $0x20] sm:$0xff] %vm111, %v983
  %1016 = vst.msk [vmem:[#allocation2 + $0x28] sm:$0xff] %vm111, %v984
  %1017 = vst.msk [vmem:[#allocation2 + $0x30] sm:$0xff] %vm111, %v985
  %1018 = vst.msk [vmem:[#allocation2 + $0x38] sm:$0xff] %vm111, %v986
  %1019 = vst.msk [vmem:[#allocation2 + $0x40] sm:$0xff] %vm111, %v987
  %1020 = vst.msk [vmem:[#allocation2 + $0x48] sm:$0xff] %vm111, %v988
  %1021 = vst.msk [vmem:[#allocation2 + $0x50] sm:$0xff] %vm111, %v989
  %1022 = vst.msk [vmem:[#allocation2 + $0x58] sm:$0xff] %vm111, %v990
  %1023 = vst.msk [vmem:[#allocation2 + $0x60] sm:$0xff] %vm111, %v991
  %1024 = vst.msk [vmem:[#allocation2 + $0x68] sm:$0xff] %vm111, %v992
  %1025 = vst.msk [vmem:[#allocation2 + $0x70] sm:$0xff] %vm111, %v993
  %1026 = vst.msk [vmem:[#allocation2 + $0x78] sm:$0xff] %vm111, %v994
  %1027 = vst.msk [vmem:[#allocation2 + $0x80] sm:$0xff] %vm111, %v995
  %1028 = vst.msk [vmem:[#allocation2 + $0x88] sm:$0xff] %vm111, %v996
  %1029 = vst.msk [vmem:[#allocation2 + $0x90] sm:$0xff] %vm111, %v997
  %1030 = vst.msk [vmem:[#allocation2 + $0x98] sm:$0xff] %vm111, %v998
  %1031 = vst.msk [vmem:[#allocation2 + $0xa0] sm:$0xff] %vm111, %v999
  %1032 = vst.msk [vmem:[#allocation2 + $0xa8] sm:$0xff] %vm111, %v1000
  %1033 = vst.msk [vmem:[#allocation2 + $0xb0] sm:$0xff] %vm111, %v1001
  %1034 = vst.msk [vmem:[#allocation2 + $0xb8] sm:$0xff] %vm111, %v1002
  %1035 = vst.msk [vmem:[#allocation2 + $0xc0] sm:$0xff] %vm111, %v1003
  %1036 = vst.msk [vmem:[#allocation2 + $0xc8] sm:$0xff] %vm111, %v1004
  %1037 = vst.msk [vmem:[#allocation2 + $0xd0] sm:$0xff] %vm111, %v1005
  %1038 = vst.msk [vmem:[#allocation2 + $0xd8] sm:$0xff] %vm111, %v1006
  %1039 = vst.msk [vmem:[#allocation2 + $0xe0] sm:$0xff] %vm111, %v1007
  %1040 = vst.msk [vmem:[#allocation2 + $0xe8] sm:$0xff] %vm111, %v1008
  %1041 = vst.msk [vmem:[#allocation2 + $0xf0] sm:$0xff] %vm111, %v1009
  %1042 = vst.msk [vmem:[#allocation2 + $0xf8] sm:$0xff] %vm111, %v1010
  // Predicated region
  $region26: #{tpu_custom_call.1} parent=0 // pred_check
    %p1043 = pneg %p20
  $region27: #{tpu_custom_call.1} parent=0 // pred_check_branch
    %1045 = sbr.rel (%p1043) target = $region29
  $region28: #{tpu_custom_call.1} parent=0 // pred_region
    %v1046 = vld [vmem:[#allocation2] sm:$0xff]
    %v1047 = vld [vmem:[#allocation2 + $0x8] sm:$0xff]
    %v1048 = vld [vmem:[#allocation2 + $0x10] sm:$0xff]
    %v1049 = vld [vmem:[#allocation2 + $0x18] sm:$0xff]
    %v1050 = vld [vmem:[#allocation2 + $0x20] sm:$0xff]
    %v1051 = vld [vmem:[#allocation2 + $0x28] sm:$0xff]
    %v1052 = vld [vmem:[#allocation2 + $0x30] sm:$0xff]
    %v1053 = vld [vmem:[#allocation2 + $0x38] sm:$0xff]
    %v1054 = vld [vmem:[#allocation2 + $0x40] sm:$0xff]
    %v1055 = vld [vmem:[#allocation2 + $0x48] sm:$0xff]
    %v1056 = vld [vmem:[#allocation2 + $0x50] sm:$0xff]
    %v1057 = vld [vmem:[#allocation2 + $0x58] sm:$0xff]
    %v1058 = vld [vmem:[#allocation2 + $0x60] sm:$0xff]
    %v1059 = vld [vmem:[#allocation2 + $0x68] sm:$0xff]
    %v1060 = vld [vmem:[#allocation2 + $0x70] sm:$0xff]
    %v1061 = vld [vmem:[#allocation2 + $0x78] sm:$0xff]
    %v1062 = vld [vmem:[#allocation2 + $0x80] sm:$0xff]
    %v1063 = vld [vmem:[#allocation2 + $0x88] sm:$0xff]
    %v1064 = vld [vmem:[#allocation2 + $0x90] sm:$0xff]
    %v1065 = vld [vmem:[#allocation2 + $0x98] sm:$0xff]
    %v1066 = vld [vmem:[#allocation2 + $0xa0] sm:$0xff]
    %v1067 = vld [vmem:[#allocation2 + $0xa8] sm:$0xff]
    %v1068 = vld [vmem:[#allocation2 + $0xb0] sm:$0xff]
    %v1069 = vld [vmem:[#allocation2 + $0xb8] sm:$0xff]
    %v1070 = vld [vmem:[#allocation2 + $0xc0] sm:$0xff]
    %v1071 = vld [vmem:[#allocation2 + $0xc8] sm:$0xff]
    %v1072 = vld [vmem:[#allocation2 + $0xd0] sm:$0xff]
    %v1073 = vld [vmem:[#allocation2 + $0xd8] sm:$0xff]
    %v1074 = vld [vmem:[#allocation2 + $0xe0] sm:$0xff]
    %v1075 = vld [vmem:[#allocation2 + $0xe8] sm:$0xff]
    %v1076 = vld [vmem:[#allocation2 + $0xf0] sm:$0xff]
    %v1077 = vld [vmem:[#allocation2 + $0xf8] sm:$0xff]
    %1078 = vst.msk [vmem:[%s5] sm:$0xff] %vm111, %v1046
    %1079 = vst.msk [vmem:[%s5 + $0x8] sm:$0xff] %vm111, %v1047
    %1080 = vst.msk [vmem:[%s5 + $0x10] sm:$0xff] %vm111, %v1048
    %1081 = vst.msk [vmem:[%s5 + $0x18] sm:$0xff] %vm111, %v1049
    %1082 = vst.msk [vmem:[%s5 + $0x20] sm:$0xff] %vm111, %v1050
    %1083 = vst.msk [vmem:[%s5 + $0x28] sm:$0xff] %vm111, %v1051
    %1084 = vst.msk [vmem:[%s5 + $0x30] sm:$0xff] %vm111, %v1052
    %1085 = vst.msk [vmem:[%s5 + $0x38] sm:$0xff] %vm111, %v1053
    %1086 = vst.msk [vmem:[%s5 + $0x40] sm:$0xff] %vm111, %v1054
    %1087 = vst.msk [vmem:[%s5 + $0x48] sm:$0xff] %vm111, %v1055
    %1088 = vst.msk [vmem:[%s5 + $0x50] sm:$0xff] %vm111, %v1056
    %1089 = vst.msk [vmem:[%s5 + $0x58] sm:$0xff] %vm111, %v1057
    %1090 = vst.msk [vmem:[%s5 + $0x60] sm:$0xff] %vm111, %v1058
    %1091 = vst.msk [vmem:[%s5 + $0x68] sm:$0xff] %vm111, %v1059
    %1092 = vst.msk [vmem:[%s5 + $0x70] sm:$0xff] %vm111, %v1060
    %1093 = vst.msk [vmem:[%s5 + $0x78] sm:$0xff] %vm111, %v1061
    %1094 = vst.msk [vmem:[%s5 + $0x80] sm:$0xff] %vm111, %v1062
    %1095 = vst.msk [vmem:[%s5 + $0x88] sm:$0xff] %vm111, %v1063
    %1096 = vst.msk [vmem:[%s5 + $0x90] sm:$0xff] %vm111, %v1064
    %1097 = vst.msk [vmem:[%s5 + $0x98] sm:$0xff] %vm111, %v1065
    %1098 = vst.msk [vmem:[%s5 + $0xa0] sm:$0xff] %vm111, %v1066
    %1099 = vst.msk [vmem:[%s5 + $0xa8] sm:$0xff] %vm111, %v1067
    %1100 = vst.msk [vmem:[%s5 + $0xb0] sm:$0xff] %vm111, %v1068
    %1101 = vst.msk [vmem:[%s5 + $0xb8] sm:$0xff] %vm111, %v1069
    %1102 = vst.msk [vmem:[%s5 + $0xc0] sm:$0xff] %vm111, %v1070
    %1103 = vst.msk [vmem:[%s5 + $0xc8] sm:$0xff] %vm111, %v1071
    %1104 = vst.msk [vmem:[%s5 + $0xd0] sm:$0xff] %vm111, %v1072
    %1105 = vst.msk [vmem:[%s5 + $0xd8] sm:$0xff] %vm111, %v1073
    %1106 = vst.msk [vmem:[%s5 + $0xe0] sm:$0xff] %vm111, %v1074
    %1107 = vst.msk [vmem:[%s5 + $0xe8] sm:$0xff] %vm111, %v1075
    %1108 = vst.msk [vmem:[%s5 + $0xf0] sm:$0xff] %vm111, %v1076
    %1109 = vst.msk [vmem:[%s5 + $0xf8] sm:$0xff] %vm111, %v1077
  $region29: #{tpu_custom_call.1} parent=0 // pred_fallthru
    _
  // Predicated region
  $region30: #{tpu_custom_call.1} parent=0 // pred_check
    _
  $region31: #{tpu_custom_call.1} parent=0 // pred_check_branch
    %1111 = sbr.rel (0) target = $region33
  $region32: #{tpu_custom_call.1} parent=0 // pred_region
    _
  $region33: #{tpu_custom_call.1} parent=0 // pred_fallthru
    _
  // Predicated region
  $region34: #{tpu_custom_call.1} parent=0 // pred_check
    _
  $region35: #{tpu_custom_call.1} parent=0 // pred_check_branch
    %1113 = sbr.rel (0) target = $region37
  $region36: #{tpu_custom_call.1} parent=0 // pred_region
    _
  $region37: #{tpu_custom_call.1} parent=0 // pred_fallthru
    _

</llo_original>
